<compile_context>
chip_gen: v7x
topology: tpu7x:2x2x1
jax: 0.10.0
libtpu: 0.0.40
codegen_flags: <defaults>
</compile_context>

<pallas_src>
import jax
import jax.numpy as jnp
from jax.experimental import pallas as pl
from jax.experimental.pallas import tpu as pltpu


def _round_up(x, m):
    return ((x + m - 1) // m) * m


def mlp_kernel(x_ref, w1_ref, b1_ref, w2_ref, b2_ref, o_ref):
    # hidden = sigmoid(x @ W1 + b1)   (bf16 MXU inputs, f32 accumulation)
    h = jnp.dot(x_ref[...], w1_ref[...], preferred_element_type=jnp.float32)
    h = h + b1_ref[...]                    # (1, H_pad) broadcasts over rows
    h = jax.nn.sigmoid(h)                  # EUP exp + EUP recip (off the VALU)
    # out = hidden @ W2 + b2  (no output activation, matches forward())
    h_bf16 = h.astype(w2_ref.dtype)        # downcast only right before the dot
    o = jnp.dot(h_bf16, w2_ref[...], preferred_element_type=jnp.float32)
    o = o + b2_ref[...]
    o_ref[...] = o.astype(o_ref.dtype)     # full-lane store (O padded to 128)


def mlp_forward(x, w1, b1, w2, b2, *, tm=256):
    """x:[B,I] f32, w1:[I,H], b1:[H], w2:[H,O], b2:[O] -> [B,O] f32.

    Weights are pre-transposed (in_features, out_features)."""
    B, I = x.shape
    H = w1.shape[1]
    O = w2.shape[1]

    # Lane-dense padding: feature dims -> multiples of 128; batch -> tile mult.
    I_p = _round_up(I, 128)
    H_p = _round_up(H, 128)
    O_p = _round_up(O, 128)
    tm = min(tm, _round_up(B, 8))          # don't over-tile tiny batches
    B_p = _round_up(B, tm)

    # Zero padding keeps the math exact: padded W1 cols -> hidden pads = 0.5,
    # but the matching W2 rows are zero, so they contribute nothing.
    bf16 = jnp.bfloat16
    xp = jnp.zeros((B_p, I_p), bf16).at[:B, :I].set(x.astype(bf16))
    w1p = jnp.zeros((I_p, H_p), bf16).at[:I, :H].set(w1.astype(bf16))
    b1p = jnp.zeros((1, H_p), jnp.float32).at[:, :H].set(
        b1.reshape(1, H).astype(jnp.float32))
    w2p = jnp.zeros((H_p, O_p), bf16).at[:H, :O].set(w2.astype(bf16))
    b2p = jnp.zeros((1, O_p), jnp.float32).at[:, :O].set(
        b2.reshape(1, O).astype(jnp.float32))

    out_padded = pl.pallas_call(
        mlp_kernel,
        out_shape=jax.ShapeDtypeStruct((B_p, O_p), jnp.float32),
        grid_spec=pltpu.PrefetchScalarGridSpec(
            num_scalar_prefetch=0,
            grid=(B_p // tm,),                              # tiles over batch
            in_specs=[
                pl.BlockSpec((tm, I_p), lambda i: (i, 0)),   # streamed x tile
                pl.BlockSpec((I_p, H_p), lambda i: (0, 0)),  # resident W1
                pl.BlockSpec((1, H_p), lambda i: (0, 0)),    # resident b1
                pl.BlockSpec((H_p, O_p), lambda i: (0, 0)),  # resident W2
                pl.BlockSpec((1, O_p), lambda i: (0, 0)),    # resident b2
            ],
            out_specs=pl.BlockSpec((tm, O_p), lambda i: (i, 0)),
        ),
        compiler_params=pltpu.CompilerParams(
            dimension_semantics=("parallel",),   # v7x: 2 TCs split batch tiles
            vmem_limit_bytes=64 * 1024 * 1024,
        ),
    )(xp, w1p, b1p, w2p, b2p)

    return out_padded[:B, :O].astype(x.dtype)


def xavier_uniform(key, fan_out, fan_in, dtype=jnp.float32):
    # matches nn.init.xavier_uniform_ for a (out, in) weight matrix
    a = jnp.sqrt(6.0 / (fan_in + fan_out))
    return jax.random.uniform(key, (fan_out, fan_in), dtype, -a, a)


def linear_bias_default(key, fan_in, fan_out, dtype=jnp.float32):
    # matches nn.Linear default bias init: U(-1/sqrt(fan_in), 1/sqrt(fan_in))
    bound = 1.0 / jnp.sqrt(jnp.asarray(fan_in, dtype))
    return jax.random.uniform(key, (fan_out,), dtype, -bound, bound)


if __name__ == "__main__":
    input_size, hidden_size, output_size = 16, 32, 8
    batch = 8

    key = jax.random.PRNGKey(0)
    kx, kw1, kb1, kw2, kb2 = jax.random.split(key, 5)

    # Deterministic parameter init (activation='sigmoid', init_method='xavier')
    w_hidden = xavier_uniform(kw1, hidden_size, input_size)     # (H, I) like nn.Linear
    b_hidden = linear_bias_default(kb1, input_size, hidden_size)
    w_output = xavier_uniform(kw2, output_size, hidden_size)    # (O, H)
    b_output = linear_bias_default(kb2, hidden_size, output_size)

    x = jax.random.normal(kx, (batch, input_size), jnp.float32)

    out = mlp_forward(
        x,
        w_hidden.T,          # [I, H]
        b_hidden,            # [H]
        w_output.T,          # [H, O]
        b_output,            # [O]
    )
    jax.block_until_ready(out)

    # Pure-JAX f32 reference (kernel uses bf16 MXU inputs -> looser tolerance)
    ref_h = jax.nn.sigmoid(x @ w_hidden.T + b_hidden)
    ref = ref_h @ w_output.T + b_output
    assert out.shape == ref.shape, "shape mismatch vs reference"
    assert jnp.allclose(out, ref, atol=3e-2, rtol=3e-2), "mismatch vs reference"

    print("KERNEL_OK")
</pallas_src>

<mosaic_0001>
module attributes {stable_mosaic.version = 11 : i64} {
  func.func @mlp_kernel(%arg0: i32, %arg1: memref<8x128xbf16, #tpu.memory_space<vmem>>, %arg2: memref<128x128xbf16, #tpu.memory_space<vmem>>, %arg3: memref<1x128xf32, #tpu.memory_space<vmem>>, %arg4: memref<128x128xbf16, #tpu.memory_space<vmem>>, %arg5: memref<1x128xf32, #tpu.memory_space<vmem>>, %arg6: memref<8x128xf32, #tpu.memory_space<vmem>>) attributes {dimension_semantics = [#tpu.dimension_semantics<parallel>], iteration_bounds = array<i64: 1>, scalar_prefetch = 0 : i64, scratch_operands = 0 : i64, tpu.core_type = #tpu.core_type<tc>, window_params = [{transform_indices = @transform_0, window_bounds = array<i64: 8, 128>}, {pipeline_mode = #tpu.pipeline_mode<synchronous>, transform_indices = @transform_1, window_bounds = array<i64: 128, 128>}, {pipeline_mode = #tpu.pipeline_mode<synchronous>, transform_indices = @transform_2, window_bounds = array<i64: 1, 128>}, {pipeline_mode = #tpu.pipeline_mode<synchronous>, transform_indices = @transform_3, window_bounds = array<i64: 128, 128>}, {pipeline_mode = #tpu.pipeline_mode<synchronous>, transform_indices = @transform_4, window_bounds = array<i64: 1, 128>}, {transform_indices = @transform_5, window_bounds = array<i64: 8, 128>}]} {
    %c0 = arith.constant 0 : index
    %c0_0 = arith.constant 0 : index
    %0 = vector.load %arg1[%c0, %c0_0] : memref<8x128xbf16, #tpu.memory_space<vmem>>, vector<8x128xbf16>
    %c0_1 = arith.constant 0 : index
    %c0_2 = arith.constant 0 : index
    %1 = vector.load %arg2[%c0_1, %c0_2] : memref<128x128xbf16, #tpu.memory_space<vmem>>, vector<128x128xbf16>
    %cst = arith.constant dense<0.000000e+00> : vector<8x128xf32>
    %2 = tpu.matmul %0, %1, %cst {dimension_numbers = #tpu.dot_dimension_numbers<[1], [0], [0], [1], [0, 0, 1, 1], [], []>} : vector<8x128xbf16>, vector<128x128xbf16>, vector<8x128xf32> -> vector<8x128xf32>
    %c0_3 = arith.constant 0 : index
    %c0_4 = arith.constant 0 : index
    %3 = vector.load %arg3[%c0_3, %c0_4] : memref<1x128xf32, #tpu.memory_space<vmem>>, vector<1x128xf32>
    %4 = vector.broadcast %3 : vector<1x128xf32> to vector<8x128xf32>
    %5 = arith.addf %2, %4 : vector<8x128xf32>
    %6 = arith.negf %5 : vector<8x128xf32>
    %7 = math.exp %6 : vector<8x128xf32>
    %cst_5 = arith.constant 1.000000e+00 : f32
    %8 = vector.broadcast %cst_5 : f32 to vector<8x128xf32>
    %9 = arith.addf %8, %7 : vector<8x128xf32>
    %10 = arith.divf %8, %9 : vector<8x128xf32>
    %11 = arith.truncf %10 : vector<8x128xf32> to vector<8x128xbf16>
    %c0_6 = arith.constant 0 : index
    %c0_7 = arith.constant 0 : index
    %12 = vector.load %arg4[%c0_6, %c0_7] : memref<128x128xbf16, #tpu.memory_space<vmem>>, vector<128x128xbf16>
    %cst_8 = arith.constant dense<0.000000e+00> : vector<8x128xf32>
    %13 = tpu.matmul %11, %12, %cst_8 {dimension_numbers = #tpu.dot_dimension_numbers<[1], [0], [0], [1], [0, 0, 1, 1], [], []>} : vector<8x128xbf16>, vector<128x128xbf16>, vector<8x128xf32> -> vector<8x128xf32>
    %c0_9 = arith.constant 0 : index
    %c0_10 = arith.constant 0 : index
    %14 = vector.load %arg5[%c0_9, %c0_10] : memref<1x128xf32, #tpu.memory_space<vmem>>, vector<1x128xf32>
    %15 = vector.broadcast %14 : vector<1x128xf32> to vector<8x128xf32>
    %16 = arith.addf %13, %15 : vector<8x128xf32>
    %c0_11 = arith.constant 0 : index
    %c0_12 = arith.constant 0 : index
    %17 = vector.load %arg6[%c0_11, %c0_12] : memref<8x128xf32, #tpu.memory_space<vmem>>, vector<8x128xf32>
    tpu.vector_store %arg6[%c0_11, %c0_12], %16 {strides = array<i32>} : memref<8x128xf32, #tpu.memory_space<vmem>>, vector<8x128xf32>,
    return
  }
  func.func @transform_0(%arg0: i32) -> (i32, i32) {
    %c0_i32 = arith.constant 0 : i32
    %c0_i32_0 = arith.constant 0 : i32
    return %arg0, %c0_i32 : i32, i32
  }
  func.func @transform_1(%arg0: i32) -> (i32, i32) {
    %c0_i32 = arith.constant 0 : i32
    %c0_i32_0 = arith.constant 0 : i32
    %c0_i32_1 = arith.constant 0 : i32
    return %c0_i32, %c0_i32_0 : i32, i32
  }
  func.func @transform_2(%arg0: i32) -> (i32, i32) {
    %c0_i32 = arith.constant 0 : i32
    %c0_i32_0 = arith.constant 0 : i32
    %c0_i32_1 = arith.constant 0 : i32
    return %c0_i32, %c0_i32_0 : i32, i32
  }
  func.func @transform_3(%arg0: i32) -> (i32, i32) {
    %c0_i32 = arith.constant 0 : i32
    %c0_i32_0 = arith.constant 0 : i32
    %c0_i32_1 = arith.constant 0 : i32
    return %c0_i32, %c0_i32_0 : i32, i32
  }
  func.func @transform_4(%arg0: i32) -> (i32, i32) {
    %c0_i32 = arith.constant 0 : i32
    %c0_i32_0 = arith.constant 0 : i32
    %c0_i32_1 = arith.constant 0 : i32
    return %c0_i32, %c0_i32_0 : i32, i32
  }
  func.func @transform_5(%arg0: i32) -> (i32, i32) {
    %c0_i32 = arith.constant 0 : i32
    %c0_i32_0 = arith.constant 0 : i32
    return %arg0, %c0_i32 : i32, i32
  }
}

</mosaic_0001>

<llo_original>
// kernel: tpu_custom_call.1
$region0: #{tpu_custom_call.1}
  #allocation0 [shape = 'u32[]', space=smem, size = 0x4, offset = 0x4, fixed_abs, tag = 'smem constant byte address 0x4 - core index']
  #allocation1 [shape = 'u32[144,128]{1,0:T(1,128)}', space=vmem, size = 0x12000, scoped, tag = 'internal scratch']
  %s0 = inlined_call_operand.hbm [shape: bf16[8,128], index: 0, kind: input, shape index: {}]
  %s1 = inlined_call_operand.hbm [shape: bf16[128,128], index: 1, kind: input, shape index: {}]
  %s2 = inlined_call_operand.hbm [shape: f32[1,128], index: 2, kind: input, shape index: {}]
  %s3 = inlined_call_operand.hbm [shape: bf16[128,128], index: 3, kind: input, shape index: {}]
  %s4 = inlined_call_operand.hbm [shape: f32[1,128], index: 4, kind: input, shape index: {}]
  %s5 = inlined_call_operand.hbm [shape: f32[8,128], index: 5, kind: output, shape index: {}]
  %s6 = sld [smem:[#allocation0]]
  $region50: #{tpu_custom_call.1} parent=0
    _
  %s8 = ssub.s32 1, %s6
  %s9 = scalar_select 0, %s8, %s6
  $region1: #{tpu_custom_call.1} parent=0
    #allocation2 [shape = 'u8[2048]{0}', space=vmem, size = 0x800, scoped, tag = 'input window, operand 0, single buffered']
    #allocation3 [shape = 's32[1]{0}', space=sflag, size = 0x4, scoped, tag = 'scoped memory for tpu_custom_call.1']
    #allocation4 [shape = 's32[1]{0}', space=sflag, size = 0x4, scoped, tag = 'scoped memory for tpu_custom_call.1']
    #allocation5 [shape = 'u8[32768]{0}', space=vmem, size = 0x8000, scoped, tag = 'input window, operand 1, single buffered']
    #allocation6 [shape = 's32[1]{0}', space=sflag, size = 0x4, scoped, tag = 'scoped memory for tpu_custom_call.1']
    #allocation7 [shape = 'u8[512]{0}', space=vmem, size = 0x400, scoped, tag = 'input window, operand 2, single buffered']
    #allocation8 [shape = 'u8[32768]{0}', space=vmem, size = 0x8000, scoped, tag = 'input window, operand 3, single buffered']
    #allocation9 [shape = 's32[1]{0}', space=sflag, size = 0x4, scoped, tag = 'scoped memory for tpu_custom_call.1']
    #allocation10 [shape = 'u8[512]{0}', space=vmem, size = 0x400, scoped, tag = 'input window, operand 4, single buffered']
    #allocation11 [shape = 'u8[4096]{0}', space=vmem, size = 0x1000, scoped, tag = 'output window, operand 0, single buffered']
    %10 = vsyncpa [#allocation3], 0
    %11 = vsyncpa [#allocation6], 0
    %12 = vsyncpa [#allocation9], 0
    %13 = vsyncpa [#allocation4], 0
    // Predicated region
    $region2: #{tpu_custom_call.1} parent=1 // pred_check
      _
    $region3: #{tpu_custom_call.1} parent=1 // pred_check_branch
      %15 = sbr.rel (0) target = $region5
    $region4: #{tpu_custom_call.1} parent=1 // pred_region
      %s17 = ssub.s32 64, 64
      %18 = vsyncadd [#allocation3], %s17
      %s20 = sshll.u32 [#allocation2], 4
      %s21 = int_to_ptr.vmem [resolvable:$true] %s20
      %23 = dma.hbm_to_vmem [thread:$0]  %s0, 64, %s21, [#allocation3]
    $region5: #{tpu_custom_call.1} parent=1 // pred_fallthru
      _
    // Predicated region
    $region6: #{tpu_custom_call.1} parent=1 // pred_check
      _
    $region7: #{tpu_custom_call.1} parent=1 // pred_check_branch
      %25 = sbr.rel (0) target = $region9
    $region8: #{tpu_custom_call.1} parent=1 // pred_region
      %s27 = ssub.s32 1024, 1024
      %28 = vsyncadd [#allocation6], %s27
      %s29 = sshll.u32 [#allocation5], 4
      %s30 = int_to_ptr.vmem [resolvable:$true] %s29
      %35 = dma.hbm_to_vmem [thread:$0]  %s1, 1024, %s30, [#allocation6], 64, 64, 4
    $region9: #{tpu_custom_call.1} parent=1 // pred_fallthru
      _
    // Predicated region
    $region10: #{tpu_custom_call.1} parent=1 // pred_check
      _
    $region11: #{tpu_custom_call.1} parent=1 // pred_check_branch
      %37 = sbr.rel (0) target = $region13
    $region12: #{tpu_custom_call.1} parent=1 // pred_region
      %s39 = ssub.s32 16, 16
      %40 = vsyncadd [#allocation6], %s39
      %s42 = sshll.u32 [#allocation7], 4
      %s43 = int_to_ptr.vmem [resolvable:$true] %s42
      %45 = dma.hbm_to_vmem [thread:$0]  %s2, 16, %s43, [#allocation6]
    $region13: #{tpu_custom_call.1} parent=1 // pred_fallthru
      _
    // Predicated region
    $region14: #{tpu_custom_call.1} parent=1 // pred_check
      _
    $region15: #{tpu_custom_call.1} parent=1 // pred_check_branch
      %47 = sbr.rel (0) target = $region17
    $region16: #{tpu_custom_call.1} parent=1 // pred_region
      %s49 = ssub.s32 1024, 1024
      %50 = vsyncadd [#allocation9], %s49
      %s51 = sshll.u32 [#allocation8], 4
      %s52 = int_to_ptr.vmem [resolvable:$true] %s51
      %57 = dma.hbm_to_vmem [thread:$0]  %s3, 1024, %s52, [#allocation9], 64, 64, 4
    $region17: #{tpu_custom_call.1} parent=1 // pred_fallthru
      _
    // Predicated region
    $region18: #{tpu_custom_call.1} parent=1 // pred_check
      _
    $region19: #{tpu_custom_call.1} parent=1 // pred_check_branch
      %59 = sbr.rel (0) target = $region21
    $region20: #{tpu_custom_call.1} parent=1 // pred_region
      %s61 = ssub.s32 16, 16
      %62 = vsyncadd [#allocation9], %s61
      %s64 = sshll.u32 [#allocation10], 4
      %s65 = int_to_ptr.vmem [resolvable:$true] %s64
      %67 = dma.hbm_to_vmem [thread:$0]  %s4, 16, %s65, [#allocation9]
    $region21: #{tpu_custom_call.1} parent=1 // pred_fallthru
      _
    // Predicated region
    $region22: #{tpu_custom_call.1} parent=1 // pred_check
      _
    $region23: #{tpu_custom_call.1} parent=1 // pred_check_branch
      %69 = sbr.rel (0) target = $region25
    $region24: #{tpu_custom_call.1} parent=1 // pred_region
      %70 = dma.done [#allocation3], 64
    $region25: #{tpu_custom_call.1} parent=1 // pred_fallthru
      _
    // Predicated region
    $region26: #{tpu_custom_call.1} parent=1 // pred_check
      _
    $region27: #{tpu_custom_call.1} parent=1 // pred_check_branch
      %72 = sbr.rel (0) target = $region29
    $region28: #{tpu_custom_call.1} parent=1 // pred_region
      %73 = dma.done [#allocation6], 1024
    $region29: #{tpu_custom_call.1} parent=1 // pred_fallthru
      _
    // Predicated region
    $region30: #{tpu_custom_call.1} parent=1 // pred_check
      _
    $region31: #{tpu_custom_call.1} parent=1 // pred_check_branch
      %75 = sbr.rel (0) target = $region33
    $region32: #{tpu_custom_call.1} parent=1 // pred_region
      %76 = dma.done [#allocation6], 16
    $region33: #{tpu_custom_call.1} parent=1 // pred_fallthru
      _
    // Predicated region
    $region34: #{tpu_custom_call.1} parent=1 // pred_check
      _
    $region35: #{tpu_custom_call.1} parent=1 // pred_check_branch
      %78 = sbr.rel (0) target = $region37
    $region36: #{tpu_custom_call.1} parent=1 // pred_region
      %79 = dma.done [#allocation9], 1024
    $region37: #{tpu_custom_call.1} parent=1 // pred_fallthru
      _
    // Predicated region
    $region38: #{tpu_custom_call.1} parent=1 // pred_check
      _
    $region39: #{tpu_custom_call.1} parent=1 // pred_check_branch
      %81 = sbr.rel (0) target = $region41
    $region40: #{tpu_custom_call.1} parent=1 // pred_region
      %82 = dma.done [#allocation9], 16
    $region41: #{tpu_custom_call.1} parent=1 // pred_fallthru
      _
    %v84 = vld [vmem:[#allocation2] sm:$0xf]
    %v85 = vld [vmem:[#allocation5] sm:$0xf]
    %v86 = vld [vmem:[#allocation5 + $0x4] sm:$0xf]
    %v87 = vld [vmem:[#allocation5 + $0x8] sm:$0xf]
    %v88 = vld [vmem:[#allocation5 + $0xc] sm:$0xf]
    %v89 = vld [vmem:[#allocation5 + $0x10] sm:$0xf]
    %v90 = vld [vmem:[#allocation5 + $0x14] sm:$0xf]
    %v91 = vld [vmem:[#allocation5 + $0x18] sm:$0xf]
    %v92 = vld [vmem:[#allocation5 + $0x1c] sm:$0xf]
    %v93 = vld [vmem:[#allocation5 + $0x20] sm:$0xf]
    %v94 = vld [vmem:[#allocation5 + $0x24] sm:$0xf]
    %v95 = vld [vmem:[#allocation5 + $0x28] sm:$0xf]
    %v96 = vld [vmem:[#allocation5 + $0x2c] sm:$0xf]
    %v97 = vld [vmem:[#allocation5 + $0x30] sm:$0xf]
    %v98 = vld [vmem:[#allocation5 + $0x34] sm:$0xf]
    %v99 = vld [vmem:[#allocation5 + $0x38] sm:$0xf]
    %v100 = vld [vmem:[#allocation5 + $0x3c] sm:$0xf]
    %v101 = vld [vmem:[#allocation7] sm:$0x1]
    %v103 = vlaneseq
    %v104 = vshrl.u32 %v103, 7
    %v105 = vsub.s32 0, %v104
    %v106 = vrot.slane %v101, %v105
    %v124 = vunpack.c.l.b16 %v85
    %v125 = vunpack.c.l.b16 %v86
    %v126 = vunpack.c.l.b16 %v87
    %v127 = vunpack.c.l.b16 %v88
    %v128 = vunpack.c.l.b16 %v89
    %v129 = vunpack.c.l.b16 %v90
    %v130 = vunpack.c.l.b16 %v91
    %v131 = vunpack.c.l.b16 %v92
    %v132 = vunpack.c.l.b16 %v93
    %v133 = vunpack.c.l.b16 %v94
    %v134 = vunpack.c.l.b16 %v95
    %v135 = vunpack.c.l.b16 %v96
    %v136 = vunpack.c.l.b16 %v97
    %v137 = vunpack.c.l.b16 %v98
    %v138 = vunpack.c.l.b16 %v99
    %v139 = vunpack.c.l.b16 %v100
    %v140 = vpack.c.b16 %v125, %v124
    %v141 = vpack.c.b16 %v127, %v126
    %v142 = vpack.c.b16 %v129, %v128
    %v143 = vpack.c.b16 %v131, %v130
    %v144 = vpack.c.b16 %v133, %v132
    %v145 = vpack.c.b16 %v135, %v134
    %v146 = vpack.c.b16 %v137, %v136
    %v147 = vpack.c.b16 %v139, %v138
    %156 = vmatprep.subr.bf16.mxu0 0
    %157 = vmatpush1.bf16.msra.mxu0 %v140
    %158 = vmatprep.subr.bf16.mxu0 0
    %159 = vmatpush1.bf16.msra.mxu0 %v141
    %160 = vmatprep.subr.bf16.mxu0 0
    %161 = vmatpush1.bf16.msra.mxu0 %v142
    %162 = vmatprep.subr.bf16.mxu0 0
    %163 = vmatpush1.bf16.msra.mxu0 %v143
    %164 = vmatprep.subr.bf16.mxu0 0
    %165 = vmatpush1.bf16.msra.mxu0 %v144
    %166 = vmatprep.subr.bf16.mxu0 0
    %167 = vmatpush1.bf16.msra.mxu0 %v145
    %168 = vmatprep.subr.bf16.mxu0 0
    %169 = vmatpush1.bf16.msra.mxu0 %v146
    %170 = vmatprep.subr.bf16.mxu0 0
    %171 = vmatpush1.bf16.msra.mxu0 %v147
    %172 = vmatprep.subr.bf16.mxu0 0
    %173 = vmatpush1.bf16.msra.mxu0 0
    %174 = vmatprep.subr.bf16.mxu0 0
    %175 = vmatpush1.bf16.msra.mxu0 0
    %176 = vmatprep.subr.bf16.mxu0 0
    %177 = vmatpush1.bf16.msra.mxu0 0
    %178 = vmatprep.subr.bf16.mxu0 0
    %179 = vmatpush1.bf16.msra.mxu0 0
    %180 = vmatprep.subr.bf16.mxu0 0
    %181 = vmatpush1.bf16.msra.mxu0 0
    %182 = vmatprep.subr.bf16.mxu0 0
    %183 = vmatpush1.bf16.msra.mxu0 0
    %184 = vmatprep.subr.bf16.mxu0 0
    %185 = vmatpush1.bf16.msra.mxu0 0
    %186 = vmatprep.subr.bf16.mxu0 0
    %187 = vmatpush1.bf16.msra.mxu0 0
    %188 = vmatprep.mubr.bf16.mxu0 0
    %189 = vmatmul.mubr.bf16.gmra.mrb[0].mxu0 %v84
    %v190 = vpop.f32.mrb[0].mxu0
    %v191 = vadd.f32 %v106, %v190
    %v192 = vpop.f32.mrb[0].mxu0
    %v193 = vpop.f32.mrb[0].mxu0
    %v194 = vpop.f32.mrb[0].mxu0
    %195 = vdwg.mxu0
    %v196 = vxor.u32 %v191, 2147483648
    %v197 = vmul.f32 %v196, 1.442695
    %v198 = vpow.pop %v197
    %v199 = vadd.f32 %v198, 1.0
    %v200 = vrcp.pop %v199
    %v201 = vmul.f32 1.0, %v200
    %v202 = vpack.c.bf16 %v201, %v201
    %v203 = vld [vmem:[#allocation8] sm:$0xf]
    %v204 = vld [vmem:[#allocation8 + $0x4] sm:$0xf]
    %v205 = vld [vmem:[#allocation8 + $0x8] sm:$0xf]
    %v206 = vld [vmem:[#allocation8 + $0xc] sm:$0xf]
    %v207 = vld [vmem:[#allocation8 + $0x10] sm:$0xf]
    %v208 = vld [vmem:[#allocation8 + $0x14] sm:$0xf]
    %v209 = vld [vmem:[#allocation8 + $0x18] sm:$0xf]
    %v210 = vld [vmem:[#allocation8 + $0x1c] sm:$0xf]
    %v211 = vld [vmem:[#allocation8 + $0x20] sm:$0xf]
    %v212 = vld [vmem:[#allocation8 + $0x24] sm:$0xf]
    %v213 = vld [vmem:[#allocation8 + $0x28] sm:$0xf]
    %v214 = vld [vmem:[#allocation8 + $0x2c] sm:$0xf]
    %v215 = vld [vmem:[#allocation8 + $0x30] sm:$0xf]
    %v216 = vld [vmem:[#allocation8 + $0x34] sm:$0xf]
    %v217 = vld [vmem:[#allocation8 + $0x38] sm:$0xf]
    %v218 = vld [vmem:[#allocation8 + $0x3c] sm:$0xf]
    %v219 = vld [vmem:[#allocation10] sm:$0x1]
    %v221 = vlaneseq
    %v222 = vshrl.u32 %v221, 7
    %v223 = vsub.s32 0, %v222
    %v224 = vrot.slane %v219, %v223
    %v242 = vunpack.c.l.b16 %v203
    %v243 = vunpack.c.l.b16 %v204
    %v244 = vunpack.c.l.b16 %v205
    %v245 = vunpack.c.l.b16 %v206
    %v246 = vunpack.c.l.b16 %v207
    %v247 = vunpack.c.l.b16 %v208
    %v248 = vunpack.c.l.b16 %v209
    %v249 = vunpack.c.l.b16 %v210
    %v250 = vunpack.c.l.b16 %v211
    %v251 = vunpack.c.l.b16 %v212
    %v252 = vunpack.c.l.b16 %v213
    %v253 = vunpack.c.l.b16 %v214
    %v254 = vunpack.c.l.b16 %v215
    %v255 = vunpack.c.l.b16 %v216
    %v256 = vunpack.c.l.b16 %v217
    %v257 = vunpack.c.l.b16 %v218
    %v258 = vpack.c.b16 %v243, %v242
    %v259 = vpack.c.b16 %v245, %v244
    %v260 = vpack.c.b16 %v247, %v246
    %v261 = vpack.c.b16 %v249, %v248
    %v262 = vpack.c.b16 %v251, %v250
    %v263 = vpack.c.b16 %v253, %v252
    %v264 = vpack.c.b16 %v255, %v254
    %v265 = vpack.c.b16 %v257, %v256
    %274 = vmatprep.subr.bf16.mxu0 0
    %275 = vmatpush1.bf16.msra.mxu0 %v258
    %276 = vmatprep.subr.bf16.mxu0 0
    %277 = vmatpush1.bf16.msra.mxu0 %v259
    %278 = vmatprep.subr.bf16.mxu0 0
    %279 = vmatpush1.bf16.msra.mxu0 %v260
    %280 = vmatprep.subr.bf16.mxu0 0
    %281 = vmatpush1.bf16.msra.mxu0 %v261
    %282 = vmatprep.subr.bf16.mxu0 0
    %283 = vmatpush1.bf16.msra.mxu0 %v262
    %284 = vmatprep.subr.bf16.mxu0 0
    %285 = vmatpush1.bf16.msra.mxu0 %v263
    %286 = vmatprep.subr.bf16.mxu0 0
    %287 = vmatpush1.bf16.msra.mxu0 %v264
    %288 = vmatprep.subr.bf16.mxu0 0
    %289 = vmatpush1.bf16.msra.mxu0 %v265
    %290 = vmatprep.subr.bf16.mxu0 0
    %291 = vmatpush1.bf16.msra.mxu0 0
    %292 = vmatprep.subr.bf16.mxu0 0
    %293 = vmatpush1.bf16.msra.mxu0 0
    %294 = vmatprep.subr.bf16.mxu0 0
    %295 = vmatpush1.bf16.msra.mxu0 0
    %296 = vmatprep.subr.bf16.mxu0 0
    %297 = vmatpush1.bf16.msra.mxu0 0
    %298 = vmatprep.subr.bf16.mxu0 0
    %299 = vmatpush1.bf16.msra.mxu0 0
    %300 = vmatprep.subr.bf16.mxu0 0
    %301 = vmatpush1.bf16.msra.mxu0 0
    %302 = vmatprep.subr.bf16.mxu0 0
    %303 = vmatpush1.bf16.msra.mxu0 0
    %304 = vmatprep.subr.bf16.mxu0 0
    %305 = vmatpush1.bf16.msra.mxu0 0
    %306 = vmatprep.mubr.bf16.mxu0 0
    %307 = vmatmul.mubr.bf16.gmra.mrb[0].mxu0 %v202
    %v308 = vpop.f32.mrb[0].mxu0
    %v309 = vadd.f32 %v224, %v308
    %v310 = vpop.f32.mrb[0].mxu0
    %v311 = vpop.f32.mrb[0].mxu0
    %v312 = vpop.f32.mrb[0].mxu0
    %313 = vdwg.mxu0
    %314 = vst [vmem:[#allocation11] sm:$0xff] %v309
    // Predicated region
    $region42: #{tpu_custom_call.1} parent=1 // pred_check
      _
    $region43: #{tpu_custom_call.1} parent=1 // pred_check_branch
      %316 = sbr.rel (0) target = $region45
    $region44: #{tpu_custom_call.1} parent=1 // pred_region
      %s318 = ssub.s32 128, 128
      %319 = vsyncadd [#allocation4], %s318
      %s321 = sshll.u32 [#allocation11], 4
      %s322 = int_to_ptr.vmem [resolvable:$true] %s321
      %324 = dma.vmem_to_hbm [thread:$0]  %s322, 128, %s5, [#allocation4]
    $region45: #{tpu_custom_call.1} parent=1 // pred_fallthru
      _
    // Predicated region
    $region46: #{tpu_custom_call.1} parent=1 // pred_check
      _
    $region47: #{tpu_custom_call.1} parent=1 // pred_check_branch
      %326 = sbr.rel (0) target = $region49
    $region48: #{tpu_custom_call.1} parent=1 // pred_region
      %327 = dma.done [#allocation4], 128
    $region49: #{tpu_custom_call.1} parent=1 // pred_fallthru
      _
    %328 = vsyncpa [#allocation3], 1
    %329 = vsyncpa [#allocation6], 1
    %330 = vsyncpa [#allocation9], 1
    %331 = vsyncpa [#allocation4], 1

</llo_original>
